<compile_context>
chip_gen: v7x
topology: tpu7x:2x2x1
jax: 0.10.0
libtpu: 0.0.40
codegen_flags: <defaults>
</compile_context>

<pallas_src>
import math

import jax
import jax.numpy as jnp
from jax.experimental import pallas as pl
from jax.experimental.pallas import tpu as pltpu

LANE = 128
SUBLANE = 8


def _round_up(x, m):
    return ((x + m - 1) // m) * m


def lora_linear_kernel(x_ref, wbT_ref, bb_ref, waT_ref, wBC_ref, o_ref, proj_ref):
    """Fused base-linear + folded LoRA path for one (tm, tn) output tile.

    x_ref    : (tm, F_in)      bf16   row tile (advances with grid i, resident across j)
    wbT_ref  : (F_in, tn)      bf16   base weight column tile (advances with grid j)
    bb_ref   : (1, tn)         f32    folded bias (b_base + b_A @ wBC) column tile
    waT_ref  : (F_in, rank_p)  bf16   encoder weight (resident, constant index_map)
    wBC_ref  : (rank_p, tn)    bf16   folded bottleneck@decoder column tile
    o_ref    : (tm, tn)        f32    output tile
    proj_ref : (tm, rank_p)    bf16   scratch: encoder projection for the current row tile
    """
    # The encoder projection depends only on the row tile i -> compute it once per i
    # (j is the fastest grid axis and is "arbitrary", so j==0 runs first on each core).
    @pl.when(pl.program_id(1) == 0)
    def _():
        proj_ref[...] = jnp.dot(
            x_ref[...], waT_ref[...],
            preferred_element_type=jnp.float32).astype(proj_ref.dtype)

    # base_module(x) with the folded bias
    base = jnp.dot(x_ref[...], wbT_ref[...],
                   preferred_element_type=jnp.float32) + bb_ref[...]

    # lora_C(lora_B(lora_A(x))) with W_B.T @ W_C.T and b_A pre-folded
    lora = jnp.dot(proj_ref[...], wBC_ref[...],
                   preferred_element_type=jnp.float32)

    o_ref[...] = (base + lora).astype(o_ref.dtype)


def prepare_params(params, *, compute_dtype=jnp.bfloat16, tile_n=512):
    """One-time weight prep: transpose, fold bottleneck/decoder/bias, pad, cast to bf16.

    Done outside the per-call forward so no HBM->HBM transposes happen per step.
    """
    w_base = params["w_base"]                       # (F_out, F_in)
    F_out, F_in = w_base.shape
    rank = params["w_A"].shape[0]

    tn = min(tile_n, _round_up(F_out, LANE))        # lane-dense output column tile
    Np = _round_up(F_out, tn)
    rank_p = _round_up(rank, LANE)                  # pad rank to a full lane width

    wbT = jnp.zeros((F_in, Np), compute_dtype).at[:, :F_out].set(
        w_base.T.astype(compute_dtype))

    waT = jnp.zeros((F_in, rank_p), compute_dtype).at[:, :rank].set(
        params["w_A"].T.astype(compute_dtype))

    # Fold bottleneck + decoder: (p @ W_B.T) @ W_C.T == p @ (W_B.T @ W_C.T). f32 fold.
    wBC = params["w_B"].T.astype(jnp.float32) @ params["w_C"].T.astype(jnp.float32)
    wBC_p = jnp.zeros((rank_p, Np), compute_dtype).at[:rank, :F_out].set(
        wBC.astype(compute_dtype))

    # Fold the encoder bias through the folded decoder into the output bias:
    #   (x @ W_A.T + b_A) @ wBC == (x @ W_A.T) @ wBC + b_A @ wBC
    bias_eff = (params["b_base"].reshape(1, F_out).astype(jnp.float32)
                + params["b_A"].reshape(1, rank).astype(jnp.float32) @ wBC)
    bb = jnp.zeros((1, Np), jnp.float32).at[:, :F_out].set(bias_eff)

    return {
        "wbT": wbT, "bb": bb, "waT": waT, "wBC": wBC_p,
        "F_in": F_in, "F_out": F_out, "rank_p": rank_p,
        "Np": Np, "tn": tn, "compute_dtype": compute_dtype,
    }


def lora_forward(x, prep, *, tile_m=256):
    """x: (batch, seq, in_features) -> (batch, seq, out_features)."""
    B, S, F_in = x.shape
    assert F_in == prep["F_in"]
    M = B * S

    tm = min(tile_m, _round_up(M, SUBLANE))
    Mp = _round_up(M, tm)
    Np, tn = prep["Np"], prep["tn"]
    rank_p = prep["rank_p"]
    cdt = prep["compute_dtype"]

    x2 = x.reshape(M, F_in).astype(cdt)
    if Mp != M:
        x2 = jnp.zeros((Mp, F_in), cdt).at[:M].set(x2)

    grid = (Mp // tm, Np // tn)

    out = pl.pallas_call(
        lora_linear_kernel,
        out_shape=jax.ShapeDtypeStruct((Mp, Np), jnp.float32),
        grid_spec=pltpu.PrefetchScalarGridSpec(
            num_scalar_prefetch=0,
            grid=grid,
            in_specs=[
                pl.BlockSpec((tm, F_in), lambda i, j: (i, 0)),        # x rows (resident over j)
                pl.BlockSpec((F_in, tn), lambda i, j: (0, j)),        # base weight cols
                pl.BlockSpec((1, tn), lambda i, j: (0, j)),           # folded bias cols
                pl.BlockSpec((F_in, rank_p), lambda i, j: (0, 0)),    # encoder (resident)
                pl.BlockSpec((rank_p, tn), lambda i, j: (0, j)),      # folded B@C cols
            ],
            out_specs=pl.BlockSpec((tm, tn), lambda i, j: (i, j)),
            scratch_shapes=[pltpu.VMEM((tm, rank_p), cdt)],           # per-row-tile projection
        ),
        compiler_params=pltpu.CompilerParams(
            # rows shard across cores; column axis stays sequential so the
            # j==0 gated projection compute is valid.
            dimension_semantics=("parallel", "arbitrary"),
            vmem_limit_bytes=48 * 1024 * 1024,
        ),
    )(x2, prep["wbT"], prep["bb"], prep["waT"], prep["wBC"])

    return out[:M, :prep["F_out"]].reshape(B, S, prep["F_out"]).astype(x.dtype)


def init_params(key, in_features, out_features, rank):
    """Synthetic init mirroring the PyTorch __init__ distributions.

    kaiming_uniform_(a=sqrt(5)) on a (fan_out, fan_in) weight gives
    U(-1/sqrt(fan_in), +1/sqrt(fan_in)); lora_B is zero-initialized.
    """
    k0, k1, k2, k3, k4 = jax.random.split(key, 5)
    b_in = 1.0 / math.sqrt(in_features)
    b_rank = 1.0 / math.sqrt(rank)
    return {
        "w_base": jax.random.uniform(k0, (out_features, in_features), jnp.float32, -b_in, b_in),
        "b_base": jax.random.uniform(k1, (out_features,), jnp.float32, -b_in, b_in),
        "w_A": jax.random.uniform(k2, (rank, in_features), jnp.float32, -b_in, b_in),
        "b_A": jax.random.uniform(k3, (rank,), jnp.float32, -b_in, b_in),
        "w_B": jnp.zeros((rank, rank), jnp.float32),  # nn.init.zeros_
        "w_C": jax.random.uniform(k4, (out_features, rank), jnp.float32, -b_rank, b_rank),
    }


def lora_forward_ref(x, params):
    """Plain-JAX f32 reference matching the PyTorch forward exactly."""
    base = jnp.einsum("bsi,oi->bso", x, params["w_base"]) + params["b_base"]
    proj = jnp.einsum("bsi,ri->bsr", x, params["w_A"]) + params["b_A"]
    bott = jnp.einsum("bsr,qr->bsq", proj, params["w_B"])
    lora = jnp.einsum("bsq,oq->bso", bott, params["w_C"])
    return base + lora


if __name__ == "__main__":
    # Small shapes chosen to exercise M-tiling with row padding (M=18 -> Mp=24, tm=8)
    # and N-tiling with column padding (F_out=200 -> Np=256, tn=128): grid = (3, 2).
    batch, seq, in_features, out_features, rank = 2, 9, 32, 200, 16

    key = jax.random.PRNGKey(0)
    kx, kp, kb = jax.random.split(key, 3)
    x = jax.random.normal(kx, (batch, seq, in_features), jnp.float32)
    params = init_params(kp, in_features, out_features, rank)

    # 1) Faithful module init (lora_B == 0, so the LoRA branch contributes exactly 0).
    prep = prepare_params(params, tile_n=128)
    out = jax.block_until_ready(lora_forward(x, prep, tile_m=8))
    ref = lora_forward_ref(x, params)
    assert out.shape == (batch, seq, out_features)
    assert jnp.allclose(out, ref, atol=2e-2, rtol=2e-2), "mismatch vs reference (zero-B)"

    # 2) Non-zero bottleneck to numerically exercise the folded LoRA path.
    params2 = dict(params)
    params2["w_B"] = jax.random.uniform(kb, (rank, rank), jnp.float32, -0.25, 0.25)
    prep2 = prepare_params(params2, tile_n=128)
    out2 = jax.block_until_ready(lora_forward(x, prep2, tile_m=8))
    ref2 = lora_forward_ref(x, params2)
    assert jnp.allclose(out2, ref2, atol=5e-2, rtol=5e-2), "mismatch vs reference (nonzero-B)"

    print("KERNEL_OK")
</pallas_src>

<mosaic_0001>
module attributes {stable_mosaic.version = 11 : i64} {
  func.func @lora_linear_kernel(%arg0: i32, %arg1: i32, %arg2: memref<8x32xbf16, #tpu.memory_space<vmem>>, %arg3: memref<32x128xbf16, #tpu.memory_space<vmem>>, %arg4: memref<1x128xf32, #tpu.memory_space<vmem>>, %arg5: memref<32x128xbf16, #tpu.memory_space<vmem>>, %arg6: memref<128x128xbf16, #tpu.memory_space<vmem>>, %arg7: memref<8x128xf32, #tpu.memory_space<vmem>>, %arg8: memref<8x128xbf16, #tpu.memory_space<vmem>>) attributes {dimension_semantics = [#tpu.dimension_semantics<parallel>, #tpu.dimension_semantics<arbitrary>], iteration_bounds = array<i64: 3, 2>, scalar_prefetch = 0 : i64, scratch_operands = 1 : i64, tpu.core_type = #tpu.core_type<tc>, window_params = [{transform_indices = @transform_0, window_bounds = array<i64: 8, 32>}, {transform_indices = @transform_1, window_bounds = array<i64: 32, 128>}, {transform_indices = @transform_2, window_bounds = array<i64: 1, 128>}, {pipeline_mode = #tpu.pipeline_mode<synchronous>, transform_indices = @transform_3, window_bounds = array<i64: 32, 128>}, {transform_indices = @transform_4, window_bounds = array<i64: 128, 128>}, {transform_indices = @transform_5, window_bounds = array<i64: 8, 128>}]} {
    %c0_i32 = arith.constant 0 : i32
    %0 = arith.cmpi eq, %arg1, %c0_i32 : i32
    %1 = arith.extui %0 : i1 to i32
    %c0_i32_0 = arith.constant 0 : i32
    %2 = arith.cmpi ne, %1, %c0_i32_0 : i32
    scf.if %2 {
      %c0_13 = arith.constant 0 : index
      %c0_14 = arith.constant 0 : index
      %14 = vector.load %arg2[%c0_13, %c0_14] : memref<8x32xbf16, #tpu.memory_space<vmem>>, vector<8x32xbf16>
      %c0_15 = arith.constant 0 : index
      %c0_16 = arith.constant 0 : index
      %15 = vector.load %arg5[%c0_15, %c0_16] : memref<32x128xbf16, #tpu.memory_space<vmem>>, vector<32x128xbf16>
      %cst_17 = arith.constant dense<0.000000e+00> : vector<8x128xf32>
      %16 = tpu.matmul %14, %15, %cst_17 {dimension_numbers = #tpu.dot_dimension_numbers<[1], [0], [0], [1], [0, 0, 1, 1], [], []>} : vector<8x32xbf16>, vector<32x128xbf16>, vector<8x128xf32> -> vector<8x128xf32>
      %17 = arith.truncf %16 : vector<8x128xf32> to vector<8x128xbf16>
      %c0_18 = arith.constant 0 : index
      %c0_19 = arith.constant 0 : index
      %18 = vector.load %arg8[%c0_18, %c0_19] : memref<8x128xbf16, #tpu.memory_space<vmem>>, vector<8x128xbf16>
      tpu.vector_store %arg8[%c0_18, %c0_19], %17 {strides = array<i32>} : memref<8x128xbf16, #tpu.memory_space<vmem>>, vector<8x128xbf16>,
    } else {
    }
    %c0 = arith.constant 0 : index
    %c0_1 = arith.constant 0 : index
    %3 = vector.load %arg2[%c0, %c0_1] : memref<8x32xbf16, #tpu.memory_space<vmem>>, vector<8x32xbf16>
    %c0_2 = arith.constant 0 : index
    %c0_3 = arith.constant 0 : index
    %4 = vector.load %arg3[%c0_2, %c0_3] : memref<32x128xbf16, #tpu.memory_space<vmem>>, vector<32x128xbf16>
    %cst = arith.constant dense<0.000000e+00> : vector<8x128xf32>
    %5 = tpu.matmul %3, %4, %cst {dimension_numbers = #tpu.dot_dimension_numbers<[1], [0], [0], [1], [0, 0, 1, 1], [], []>} : vector<8x32xbf16>, vector<32x128xbf16>, vector<8x128xf32> -> vector<8x128xf32>
    %c0_4 = arith.constant 0 : index
    %c0_5 = arith.constant 0 : index
    %6 = vector.load %arg4[%c0_4, %c0_5] : memref<1x128xf32, #tpu.memory_space<vmem>>, vector<1x128xf32>
    %7 = vector.broadcast %6 : vector<1x128xf32> to vector<8x128xf32>
    %8 = arith.addf %5, %7 : vector<8x128xf32>
    %c0_6 = arith.constant 0 : index
    %c0_7 = arith.constant 0 : index
    %9 = vector.load %arg8[%c0_6, %c0_7] : memref<8x128xbf16, #tpu.memory_space<vmem>>, vector<8x128xbf16>
    %c0_8 = arith.constant 0 : index
    %c0_9 = arith.constant 0 : index
    %10 = vector.load %arg6[%c0_8, %c0_9] : memref<128x128xbf16, #tpu.memory_space<vmem>>, vector<128x128xbf16>
    %cst_10 = arith.constant dense<0.000000e+00> : vector<8x128xf32>
    %11 = tpu.matmul %9, %10, %cst_10 {dimension_numbers = #tpu.dot_dimension_numbers<[1], [0], [0], [1], [0, 0, 1, 1], [], []>} : vector<8x128xbf16>, vector<128x128xbf16>, vector<8x128xf32> -> vector<8x128xf32>
    %12 = arith.addf %8, %11 : vector<8x128xf32>
    %c0_11 = arith.constant 0 : index
    %c0_12 = arith.constant 0 : index
    %13 = vector.load %arg7[%c0_11, %c0_12] : memref<8x128xf32, #tpu.memory_space<vmem>>, vector<8x128xf32>
    tpu.vector_store %arg7[%c0_11, %c0_12], %12 {strides = array<i32>} : memref<8x128xf32, #tpu.memory_space<vmem>>, vector<8x128xf32>,
    return
  }
  func.func @transform_0(%arg0: i32, %arg1: i32) -> (i32, i32) {
    %c0_i32 = arith.constant 0 : i32
    %c0_i32_0 = arith.constant 0 : i32
    return %arg0, %c0_i32 : i32, i32
  }
  func.func @transform_1(%arg0: i32, %arg1: i32) -> (i32, i32) {
    %c0_i32 = arith.constant 0 : i32
    %c0_i32_0 = arith.constant 0 : i32
    return %c0_i32, %arg1 : i32, i32
  }
  func.func @transform_2(%arg0: i32, %arg1: i32) -> (i32, i32) {
    %c0_i32 = arith.constant 0 : i32
    %c0_i32_0 = arith.constant 0 : i32
    return %c0_i32, %arg1 : i32, i32
  }
  func.func @transform_3(%arg0: i32, %arg1: i32) -> (i32, i32) {
    %c0_i32 = arith.constant 0 : i32
    %c0_i32_0 = arith.constant 0 : i32
    %c0_i32_1 = arith.constant 0 : i32
    return %c0_i32, %c0_i32_0 : i32, i32
  }
  func.func @transform_4(%arg0: i32, %arg1: i32) -> (i32, i32) {
    %c0_i32 = arith.constant 0 : i32
    %c0_i32_0 = arith.constant 0 : i32
    return %c0_i32, %arg1 : i32, i32
  }
  func.func @transform_5(%arg0: i32, %arg1: i32) -> (i32, i32) {
    %c0_i32 = arith.constant 0 : i32
    return %arg0, %arg1 : i32, i32
  }
}

</mosaic_0001>

<llo_original>
// kernel: tpu_custom_call.1
$region0: #{tpu_custom_call.1}
  #allocation0 [shape = 'u32[]', space=smem, size = 0x4, offset = 0x4, fixed_abs, tag = 'smem constant byte address 0x4 - core index']
  #allocation1 [shape = 'u32[144,128]{1,0:T(1,128)}', space=vmem, size = 0x12000, scoped, tag = 'internal scratch']
  #allocation2 [shape = 'bf16[8,128]{1,0:T(8,128)(2,1)}', space=vmem, size = 0x800, scoped, tag = 'scratch operand']
  %s0 = inlined_call_operand.hbm [shape: bf16[24,32], index: 0, kind: input, shape index: {}]
  %s1 = inlined_call_operand.hbm [shape: bf16[32,256], index: 1, kind: input, shape index: {}]
  %s2 = inlined_call_operand.vmem [shape: f32[1,256], index: 2, kind: input, shape index: {}]
  %s3 = inlined_call_operand.hbm [shape: bf16[32,128], index: 3, kind: input, shape index: {}]
  %s4 = inlined_call_operand.hbm [shape: bf16[128,256], index: 4, kind: input, shape index: {}]
  %s5 = inlined_call_operand.hbm [shape: f32[24,256], index: 5, kind: output, shape index: {}]
  %s6 = sld [smem:[#allocation0]]
  $region73: #{tpu_custom_call.1} parent=0
    _
  %s8 = ssub.s32 1, %s6
  %s9 = scalar_select 0, %s8, %s6
  $region1: #{tpu_custom_call.1} parent=0
    #allocation3 [shape = 'u8[4096]{0}', space=vmem, size = 0x1000, scoped, tag = 'input window, operand 0']
    #allocation4 [shape = 's32[2]{0}', space=sflag, size = 0x8, scoped, tag = 'scoped memory for tpu_custom_call.1']
    #allocation5 [shape = 's32[2]{0}', space=sflag, size = 0x8, scoped, tag = 'scoped memory for tpu_custom_call.1']
    #allocation6 [shape = 'u8[16384]{0}', space=vmem, size = 0x4000, scoped, tag = 'input window, operand 1']
    #allocation7 [shape = 's32[2]{0}', space=sflag, size = 0x8, scoped, tag = 'scoped memory for tpu_custom_call.1']
    #allocation8 [shape = 'u8[8192]{0}', space=vmem, size = 0x2000, scoped, tag = 'input window, operand 3, single buffered']
    #allocation9 [shape = 'u8[65536]{0}', space=vmem, size = 0x10000, scoped, tag = 'input window, operand 4']
    #allocation10 [shape = 's32[2]{0}', space=sflag, size = 0x8, scoped, tag = 'scoped memory for tpu_custom_call.1']
    #allocation11 [shape = 'u8[8192]{0}', space=vmem, size = 0x2000, scoped, tag = 'output window, operand 0']
    %10 = vsyncpa [#allocation4], 0
    %s11 = scalar_lea.sflag [#allocation4], 1
    %12 = vsyncpa %s11, 0
    %13 = vsyncpa [#allocation7], 0
    %s14 = scalar_lea.sflag [#allocation7], 1
    %15 = vsyncpa %s14, 0
    %16 = vsyncpa [#allocation10], 0
    %s17 = scalar_lea.sflag [#allocation10], 1
    %18 = vsyncpa %s17, 0
    %19 = vsyncpa [#allocation5], 0
    %s20 = scalar_lea.sflag [#allocation5], 1
    %21 = vsyncpa %s20, 0
    loop: start=0, step=1, limit=8
    $region2: #{tpu_custom_call.1} parent=1 // loop_pre_header
      _
    $region3: #{tpu_custom_call.1} parent=1 // loop_header
      %s23 = sphi 0, %s27
      %p24 = scmp.ge.s32.totalorder %s23, 8
      %s30 = sphi 0, %s42
      %s31 = sphi 0, %s38
      %s32 = sphi 0, %s30
      %s33 = sphi 0, %s31
      %s34 = sphi 0, %s32
      %s35 = sphi 0, %s33
      %s45 = sphi 0, %s47
      %s48 = sphi 0, %s45
      %s49 = sphi 0, %s48
      %s65 = sphi 0, %s49
      %s71 = sphi 0, %s73
      %s74 = sphi 0, %s71
      %s75 = sphi 0, %s74
      %s91 = sphi 0, %s75
      %s97 = sphi 0, %s99
      %s100 = sphi 0, %s97
      %s101 = sphi 0, %s100
      %s117 = sphi 0, %s101
      %s121 = sphi 0, %s121
      %s123 = sphi 0, %s121
      %s124 = sphi 0, %s123
      %s138 = sphi 0, %s124
      %s144 = sphi 0, %s146
      %s147 = sphi 0, %s144
      %s148 = sphi 0, %s147
      %s164 = sphi 0, %s148
      %s172 = sphi 0, %s174
      %s175 = sphi 0, %s172
      %s176 = sphi 0, %s175
      %s192 = sphi 0, %s176
    $region4: #{tpu_custom_call.1} parent=1 // loop_header_branch
      %26 = sbr.rel (%p24) target = $region8
    $region5: #{tpu_custom_call.1} parent=1 // loop_body
      %s28 = ssub.s32 %s23, 1
      %s29 = ssub.s32 %s23, 2
      %s36 = sadd.s32 1, %s31
      %p37 = scmp.ge.s32.totalorder %s36, 2
      %s38 = scalar_select %p37, 0, %s36
      %s39 = sadd.s32 1, %s30
      %s40 = scalar_select %p37, %s39, %s30
      %p41 = scmp.ge.s32.totalorder %s40, 3
      %s42 = scalar_select %p41, 0, %s40
      %s43 = ssub.s32 %s30, %s42
      %p44 = scmp.eq.s32.totalorder %s43, 0
      %s46 = sadd.s32 %s45, 1
      %s47 = scalar_select %p44, %s45, %s46
      %p50 = pneg %p44
      %p51 = scmp.eq.s32.totalorder %s23, 5
      %p52 = por %p50, %p51
      %p53 = scmp.ne.s32.totalorder %s45, %s48
      %p54 = scmp.eq.s32.totalorder %s23, 0
      %p55 = por %p53, %p54
      %p56 = scmp.ne.s32.totalorder %s45, %s48
      %p57 = scmp.eq.s32.totalorder %s28, 5
      %p58 = por %p56, %p57
      %p59 = scmp.ne.s32.totalorder %s48, %s49
      %p60 = scmp.eq.s32.totalorder %s28, 0
      %p61 = por %p59, %p60
      %p62 = scmp.ne.s32.totalorder %s48, %s49
      %p63 = scmp.eq.s32.totalorder %s29, 5
      %p64 = por %p62, %p63
      %p66 = scmp.ne.s32.totalorder %s49, %s65
      %p67 = scmp.eq.s32.totalorder %s29, 0
      %p68 = por %p66, %p67
      %s69 = ssub.s32 %s31, %s38
      %p70 = scmp.eq.s32.totalorder %s69, 0
      %s72 = sadd.s32 %s71, 1
      %s73 = scalar_select %p70, %s71, %s72
      %p76 = pneg %p70
      %p77 = scmp.eq.s32.totalorder %s23, 5
      %p78 = por %p76, %p77
      %p79 = scmp.ne.s32.totalorder %s71, %s74
      %p80 = scmp.eq.s32.totalorder %s23, 0
      %p81 = por %p79, %p80
      %p82 = scmp.ne.s32.totalorder %s71, %s74
      %p83 = scmp.eq.s32.totalorder %s28, 5
      %p84 = por %p82, %p83
      %p85 = scmp.ne.s32.totalorder %s74, %s75
      %p86 = scmp.eq.s32.totalorder %s28, 0
      %p87 = por %p85, %p86
      %p88 = scmp.ne.s32.totalorder %s74, %s75
      %p89 = scmp.eq.s32.totalorder %s29, 5
      %p90 = por %p88, %p89
      %p92 = scmp.ne.s32.totalorder %s75, %s91
      %p93 = scmp.eq.s32.totalorder %s29, 0
      %p94 = por %p92, %p93
      %s95 = ssub.s32 %s31, %s38
      %p96 = scmp.eq.s32.totalorder %s95, 0
      %s98 = sadd.s32 %s97, 1
      %s99 = scalar_select %p96, %s97, %s98
      %p102 = pneg %p96
      %p103 = scmp.eq.s32.totalorder %s23, 5
      %p104 = por %p102, %p103
      %p105 = scmp.ne.s32.totalorder %s97, %s100
      %p106 = scmp.eq.s32.totalorder %s23, 0
      %p107 = por %p105, %p106
      %p108 = scmp.ne.s32.totalorder %s97, %s100
      %p109 = scmp.eq.s32.totalorder %s28, 5
      %p110 = por %p108, %p109
      %p111 = scmp.ne.s32.totalorder %s100, %s101
      %p112 = scmp.eq.s32.totalorder %s28, 0
      %p113 = por %p111, %p112
      %p114 = scmp.ne.s32.totalorder %s100, %s101
      %p115 = scmp.eq.s32.totalorder %s29, 5
      %p116 = por %p114, %p115
      %p118 = scmp.ne.s32.totalorder %s101, %s117
      %p119 = scmp.eq.s32.totalorder %s29, 0
      %p120 = por %p118, %p119
      %s122 = sadd.s32 %s121, 1
      %p125 = scmp.eq.s32.totalorder %s23, 5
      %p126 = scmp.ne.s32.totalorder %s121, %s123
      %p127 = scmp.eq.s32.totalorder %s23, 0
      %p128 = por %p126, %p127
      %p129 = scmp.ne.s32.totalorder %s121, %s123
      %p130 = scmp.eq.s32.totalorder %s28, 5
      %p131 = por %p129, %p130
      %p132 = scmp.ne.s32.totalorder %s123, %s124
      %p133 = scmp.eq.s32.totalorder %s28, 0
      %p134 = por %p132, %p133
      %p135 = scmp.ne.s32.totalorder %s123, %s124
      %p136 = scmp.eq.s32.totalorder %s29, 5
      %p137 = por %p135, %p136
      %p139 = scmp.ne.s32.totalorder %s124, %s138
      %p140 = scmp.eq.s32.totalorder %s29, 0
      %p141 = por %p139, %p140
      %s142 = ssub.s32 %s31, %s38
      %p143 = scmp.eq.s32.totalorder %s142, 0
      %s145 = sadd.s32 %s144, 1
      %s146 = scalar_select %p143, %s144, %s145
      %p149 = pneg %p143
      %p150 = scmp.eq.s32.totalorder %s23, 5
      %p151 = por %p149, %p150
      %p152 = scmp.ne.s32.totalorder %s144, %s147
      %p153 = scmp.eq.s32.totalorder %s23, 0
      %p154 = por %p152, %p153
      %p155 = scmp.ne.s32.totalorder %s144, %s147
      %p156 = scmp.eq.s32.totalorder %s28, 5
      %p157 = por %p155, %p156
      %p158 = scmp.ne.s32.totalorder %s147, %s148
      %p159 = scmp.eq.s32.totalorder %s28, 0
      %p160 = por %p158, %p159
      %p161 = scmp.ne.s32.totalorder %s147, %s148
      %p162 = scmp.eq.s32.totalorder %s29, 5
      %p163 = por %p161, %p162
      %p165 = scmp.ne.s32.totalorder %s148, %s164
      %p166 = scmp.eq.s32.totalorder %s29, 0
      %p167 = por %p165, %p166
      %s168 = ssub.s32 %s30, %s42
      %s169 = ssub.s32 %s31, %s38
      %s170 = sor.u32 %s168, %s169
      %p171 = scmp.eq.s32.totalorder %s170, 0
      %s173 = sadd.s32 %s172, 1
      %s174 = scalar_select %p171, %s172, %s173
      %p177 = pneg %p171
      %p178 = scmp.eq.s32.totalorder %s23, 5
      %p179 = por %p177, %p178
      %p180 = scmp.ne.s32.totalorder %s172, %s175
      %p181 = scmp.eq.s32.totalorder %s23, 0
      %p182 = por %p180, %p181
      %p183 = scmp.ne.s32.totalorder %s172, %s175
      %p184 = scmp.eq.s32.totalorder %s28, 5
      %p185 = por %p183, %p184
      %p186 = scmp.ne.s32.totalorder %s175, %s176
      %p187 = scmp.eq.s32.totalorder %s28, 0
      %p188 = por %p186, %p187
      %p189 = scmp.ne.s32.totalorder %s175, %s176
      %p190 = scmp.eq.s32.totalorder %s29, 5
      %p191 = por %p189, %p190
      %p193 = scmp.ne.s32.totalorder %s176, %s192
      %p194 = scmp.eq.s32.totalorder %s29, 0
      %p195 = por %p193, %p194
      %p196 = scmp.le.s32.totalorder 1, %s23
      %p197 = scmp.lt.s32.totalorder %s23, 7
      %p198 = pnand %p196, %p197
      %p199 = pneg %p198
      // Predicated region
      $region9: #{tpu_custom_call.1} parent=5 // pred_check
        _
      $region10: #{tpu_custom_call.1} parent=5 // pred_check_branch
        %201 = sbr.rel (%p198) target = $region12
      $region11: #{tpu_custom_call.1} parent=5 // pred_region
        %s202 = ssub.s32 %s23, 1
        // Predicated region
        $region13: #{tpu_custom_call.1} parent=11 // pred_check
          %p203 = pneg %p134
        $region14: #{tpu_custom_call.1} parent=11 // pred_check_branch
          %205 = sbr.rel (%p203) target = $region16
        $region15: #{tpu_custom_call.1} parent=11 // pred_region
          %s207 = ssub.s32 256, 256
          %208 = vsyncadd [#allocation7], %s207
          %s209 = sshll.u32 [#allocation8], 4
          %s210 = int_to_ptr.vmem [resolvable:$true] %s209
          %215 = dma.hbm_to_vmem [thread:$0]  %s3, 256, %s210, [#allocation7], 64, 64, 4
        $region16: #{tpu_custom_call.1} parent=11 // pred_fallthru
          _
      $region12: #{tpu_custom_call.1} parent=5 // pred_fallthru
        _
      %p216 = scmp.lt.s32.totalorder %s23, 6
      // Predicated region
      $region17: #{tpu_custom_call.1} parent=5 // pred_check
        %p217 = pneg %p216
      $region18: #{tpu_custom_call.1} parent=5 // pred_check_branch
        %219 = sbr.rel (%p217) target = $region20
      $region19: #{tpu_custom_call.1} parent=5 // pred_region
        // Predicated region
        $region21: #{tpu_custom_call.1} parent=19 // pred_check
          %p220 = pneg %p55
        $region22: #{tpu_custom_call.1} parent=19 // pred_check_branch
          %222 = sbr.rel (%p220) target = $region24
        $region23: #{tpu_custom_call.1} parent=19 // pred_region
          %s223 = sand.u32 %s45, 1
          %s224 = scalar_lea.sflag [#allocation4], %s223
          %s225 = sand.u32 %s45, 1
          %s226 = smul.addr %s225, 4
          %s227 = scalar_lea.vmem [#allocation3], %s226
          %s229 = ssub.s32 64, 64
          %230 = vsyncadd %s224, %s229
          %s231 = smul.addr %s30, 64
          %s232 = scalar_lea.hbm %s0, %s231
          %s234 = sshll.u32 %s227, 4
          %s235 = int_to_ptr.vmem [resolvable:$true] %s234
          %237 = dma.hbm_to_vmem [thread:$0]  %s232, 64, %s235, %s224
        $region24: #{tpu_custom_call.1} parent=19 // pred_fallthru
          _
        // Predicated region
        $region25: #{tpu_custom_call.1} parent=19 // pred_check
          %p238 = pneg %p81
        $region26: #{tpu_custom_call.1} parent=19 // pred_check_branch
          %240 = sbr.rel (%p238) target = $region28
        $region27: #{tpu_custom_call.1} parent=19 // pred_region
          %s241 = sand.u32 %s23, 1
          %s242 = scalar_lea.sflag [#allocation7], %s241
          %s243 = sand.u32 %s71, 1
          %s244 = smul.addr %s243, 16
          %s245 = scalar_lea.vmem [#allocation6], %s244
          %s247 = ssub.s32 256, 256
          %248 = vsyncadd %s242, %s247
          %s249 = smul.addr %s31, 64
          %s250 = scalar_lea.hbm %s1, %s249
          %s251 = sshll.u32 %s245, 4
          %s252 = int_to_ptr.vmem [resolvable:$true] %s251
          %257 = dma.hbm_to_vmem [thread:$0]  %s250, 256, %s252, %s242, 128, 64, 4
        $region28: #{tpu_custom_call.1} parent=19 // pred_fallthru
          _
        // Predicated region
        $region29: #{tpu_custom_call.1} parent=19 // pred_check
          %p258 = pneg %p107
        $region30: #{tpu_custom_call.1} parent=19 // pred_check_branch
          %260 = sbr.rel (%p258) target = $region32
        $region31: #{tpu_custom_call.1} parent=19 // pred_region
          %p261 = scmp.lt.s32.totalorder %s31, 1
          %s262 = scalar_select %p261, %s31, 1
          %s263 = scalar_lea.vmem %s2, %s262
        $region32: #{tpu_custom_call.1} parent=19 // pred_fallthru
          _
        // Predicated region
        $region33: #{tpu_custom_call.1} parent=19 // pred_check
          %p264 = pneg %p154
        $region34: #{tpu_custom_call.1} parent=19 // pred_check_branch
          %266 = sbr.rel (%p264) target = $region36
        $region35: #{tpu_custom_call.1} parent=19 // pred_region
          %s267 = sand.u32 %s144, 1
          %s268 = scalar_lea.sflag [#allocation10], %s267
          %s269 = sand.u32 %s144, 1
          %s270 = smul.addr %s269, 64
          %s271 = scalar_lea.vmem [#allocation9], %s270
          %s273 = ssub.s32 1024, 1024
          %274 = vsyncadd %s268, %s273
          %s275 = smul.addr %s31, 64
          %s276 = scalar_lea.hbm %s4, %s275
          %s277 = sshll.u32 %s271, 4
          %s278 = int_to_ptr.vmem [resolvable:$true] %s277
          %283 = dma.hbm_to_vmem [thread:$0]  %s276, 1024, %s278, %s268, 128, 64, 4
        $region36: #{tpu_custom_call.1} parent=19 // pred_fallthru
          _
      $region20: #{tpu_custom_call.1} parent=5 // pred_fallthru
        _
      %p284 = scmp.le.s32.totalorder 1, %s23
      %p285 = scmp.lt.s32.totalorder %s23, 7
      %p286 = pnand %p284, %p285
      %p287 = pneg %p286
      // Predicated region
      $region37: #{tpu_custom_call.1} parent=5 // pred_check
        _
      $region38: #{tpu_custom_call.1} parent=5 // pred_check_branch
        %289 = sbr.rel (%p286) target = $region40
      $region39: #{tpu_custom_call.1} parent=5 // pred_region
        %s290 = ssub.s32 %s23, 1
        %s291 = sand.u32 %s48, 1
        %s292 = scalar_lea.sflag [#allocation4], %s291
        %s293 = sand.u32 %s48, 1
        %s294 = smul.addr %s293, 4
        %s295 = scalar_lea.vmem [#allocation3], %s294
        // Predicated region
        $region41: #{tpu_custom_call.1} parent=39 // pred_check
          %p296 = pneg %p61
        $region42: #{tpu_custom_call.1} parent=39 // pred_check_branch
          %298 = sbr.rel (%p296) target = $region44
        $region43: #{tpu_custom_call.1} parent=39 // pred_region
          %299 = dma.done %s292, 64
        $region44: #{tpu_custom_call.1} parent=39 // pred_fallthru
          _
        %s300 = sand.u32 %s28, 1
        %s301 = scalar_lea.sflag [#allocation7], %s300
        %s302 = sand.u32 %s74, 1
        %s303 = smul.addr %s302, 16
        %s304 = scalar_lea.vmem [#allocation6], %s303
        // Predicated region
        $region45: #{tpu_custom_call.1} parent=39 // pred_check
          %p305 = pneg %p87
        $region46: #{tpu_custom_call.1} parent=39 // pred_check_branch
          %307 = sbr.rel (%p305) target = $region48
        $region47: #{tpu_custom_call.1} parent=39 // pred_region
          %308 = dma.done %s301, 256
        $region48: #{tpu_custom_call.1} parent=39 // pred_fallthru
          _
        // Predicated region
        $region49: #{tpu_custom_call.1} parent=39 // pred_check
          %p309 = pneg %p134
        $region50: #{tpu_custom_call.1} parent=39 // pred_check_branch
          %311 = sbr.rel (%p309) target = $region52
        $region51: #{tpu_custom_call.1} parent=39 // pred_region
          %312 = dma.done [#allocation7], 256
        $region52: #{tpu_custom_call.1} parent=39 // pred_fallthru
          _
        %s313 = sand.u32 %s147, 1
        %s314 = scalar_lea.sflag [#allocation10], %s313
        %s315 = sand.u32 %s147, 1
        %s316 = smul.addr %s315, 64
        %s317 = scalar_lea.vmem [#allocation9], %s316
        // Predicated region
        $region53: #{tpu_custom_call.1} parent=39 // pred_check
          %p318 = pneg %p160
        $region54: #{tpu_custom_call.1} parent=39 // pred_check_branch
          %320 = sbr.rel (%p318) target = $region56
        $region55: #{tpu_custom_call.1} parent=39 // pred_region
          %321 = dma.done %s314, 1024
        $region56: #{tpu_custom_call.1} parent=39 // pred_fallthru
          _
        %s322 = sand.u32 %s48, 1
        %s323 = scalar_lea.sflag [#allocation4], %s322
        %s324 = sand.u32 %s48, 1
        %s325 = smul.addr %s324, 4
        %s326 = scalar_lea.vmem [#allocation3], %s325
        %p327 = pneg %p61
        %p328 = pneg %p58
        %s329 = sand.u32 %s28, 1
        %s330 = scalar_lea.sflag [#allocation7], %s329
        %s331 = sand.u32 %s74, 1
        %s332 = smul.addr %s331, 16
        %s333 = scalar_lea.vmem [#allocation6], %s332
        %p334 = pneg %p87
        %p335 = pneg %p84
        %p336 = scmp.lt.s32.totalorder %s33, 1
        %s337 = scalar_select %p336, %s33, 1
        %s338 = scalar_lea.vmem %s2, %s337
        %p339 = pneg %p113
        %p340 = pneg %p110
        %p341 = pneg %p134
        %p342 = pneg %p131
        %s343 = sand.u32 %s147, 1
        %s344 = scalar_lea.sflag [#allocation10], %s343
        %s345 = sand.u32 %s147, 1
        %s346 = smul.addr %s345, 64
        %s347 = scalar_lea.vmem [#allocation9], %s346
        %p348 = pneg %p160
        %p349 = pneg %p157
        %p350 = pneg %p188
        %p351 = pneg %p185
        %s352 = sand.u32 %s175, 1
        %s353 = scalar_lea.sflag [#allocation5], %s352
        %s354 = sand.u32 %s175, 1
        %s355 = smul.addr %s354, 8
        %s356 = scalar_lea.vmem [#allocation11], %s355
        %p357 = scmp.lt.s32.totalorder %s33, 1
        %s358 = scalar_select %p357, %s33, 1
        %s359 = scalar_lea.vmem %s2, %s358
        %p361 = scmp.eq.s32.totalorder %s33, 0
        // Predicated region
        $region57: #{tpu_custom_call.1} parent=39 // pred_check
          %p362 = pneg %p361
        $region58: #{tpu_custom_call.1} parent=39 // pred_check_branch
          %364 = sbr.rel (%p362) target = $region60
        $region59: #{tpu_custom_call.1} parent=39 // pred_region
          %v365 = vld [vmem:[%s295] sm:$0xf]
          %v366 = vld [vmem:[#allocation8] sm:$0xf]
          %v367 = vld [vmem:[#allocation8 + $0x4] sm:$0xf]
          %v368 = vld [vmem:[#allocation8 + $0x8] sm:$0xf]
          %v369 = vld [vmem:[#allocation8 + $0xc] sm:$0xf]
          %v374 = vunpack.c.l.b16 %v366
          %v375 = vunpack.c.l.b16 %v367
          %v376 = vunpack.c.l.b16 %v368
          %v377 = vunpack.c.l.b16 %v369
          %v378 = vpack.c.b16 %v375, %v374
          %v379 = vpack.c.b16 %v377, %v376
          %vm382 = vcmask 261120
          %v384 = vsel %vm382, %v365, 0
          %386 = vmatprep.subr.bf16.mxu0 0
          %387 = vmatpush1.bf16.msra.mxu0 %v378
          %388 = vmatprep.subr.bf16.mxu0 0
          %389 = vmatpush1.bf16.msra.mxu0 %v379
          %390 = vmatprep.subr.bf16.mxu0 0
          %391 = vmatpush1.bf16.msra.mxu0 0
          %392 = vmatprep.subr.bf16.mxu0 0
          %393 = vmatpush1.bf16.msra.mxu0 0
          %394 = vmatprep.subr.bf16.mxu0 0
          %395 = vmatpush1.bf16.msra.mxu0 0
          %396 = vmatprep.subr.bf16.mxu0 0
          %397 = vmatpush1.bf16.msra.mxu0 0
          %398 = vmatprep.subr.bf16.mxu0 0
          %399 = vmatpush1.bf16.msra.mxu0 0
          %400 = vmatprep.subr.bf16.mxu0 0
          %401 = vmatpush1.bf16.msra.mxu0 0
          %402 = vmatprep.subr.bf16.mxu0 0
          %403 = vmatpush1.bf16.msra.mxu0 0
          %404 = vmatprep.subr.bf16.mxu0 0
          %405 = vmatpush1.bf16.msra.mxu0 0
          %406 = vmatprep.subr.bf16.mxu0 0
          %407 = vmatpush1.bf16.msra.mxu0 0
          %408 = vmatprep.subr.bf16.mxu0 0
          %409 = vmatpush1.bf16.msra.mxu0 0
          %410 = vmatprep.subr.bf16.mxu0 0
          %411 = vmatpush1.bf16.msra.mxu0 0
          %412 = vmatprep.subr.bf16.mxu0 0
          %413 = vmatpush1.bf16.msra.mxu0 0
          %414 = vmatprep.subr.bf16.mxu0 0
          %415 = vmatpush1.bf16.msra.mxu0 0
          %416 = vmatprep.subr.bf16.mxu0 0
          %417 = vmatpush1.bf16.msra.mxu0 0
          %418 = vmatprep.mubr.bf16.mxu0 0
          %419 = vmatmul.mubr.bf16.gmra.mrb[0].mxu0 %v384
          %v420 = vpop.f32.mrb[0].mxu0
          %v421 = vadd.f32 0.0, %v420
          %v422 = vpop.f32.mrb[0].mxu0
          %v423 = vpop.f32.mrb[0].mxu0
          %v424 = vpop.f32.mrb[0].mxu0
          %425 = vdwg.mxu0
          %v426 = vpack.c.bf16 %v421, %v421
          %427 = vst [vmem:[#allocation2] sm:$0xf] %v426
        $region60: #{tpu_custom_call.1} parent=39 // pred_fallthru
          _
        %v428 = vld [vmem:[%s295] sm:$0xf]
        %v429 = vld [vmem:[%s304] sm:$0xf]
        %v430 = vld [vmem:[%s304 + $0x4] sm:$0xf]
        %v431 = vld [vmem:[%s304 + $0x8] sm:$0xf]
        %v432 = vld [vmem:[%s304 + $0xc] sm:$0xf]
        %v433 = vld [vmem:[%s359] sm:$0x1]
        %v435 = vlaneseq
        %v436 = vshrl.u32 %v435, 7
        %v437 = vsub.s32 0, %v436
        %v438 = vrot.slane %v433, %v437
        %v444 = vunpack.c.l.b16 %v429
        %v445 = vunpack.c.l.b16 %v430
        %v446 = vunpack.c.l.b16 %v431
        %v447 = vunpack.c.l.b16 %v432
        %v448 = vpack.c.b16 %v445, %v444
        %v449 = vpack.c.b16 %v447, %v446
        %vm452 = vcmask 261120
        %v454 = vsel %vm452, %v428, 0
        %456 = vmatprep.subr.bf16.mxu0 0
        %457 = vmatpush1.bf16.msra.mxu0 %v448
        %458 = vmatprep.subr.bf16.mxu0 0
        %459 = vmatpush1.bf16.msra.mxu0 %v449
        %460 = vmatprep.subr.bf16.mxu0 0
        %461 = vmatpush1.bf16.msra.mxu0 0
        %462 = vmatprep.subr.bf16.mxu0 0
        %463 = vmatpush1.bf16.msra.mxu0 0
        %464 = vmatprep.subr.bf16.mxu0 0
        %465 = vmatpush1.bf16.msra.mxu0 0
        %466 = vmatprep.subr.bf16.mxu0 0
        %467 = vmatpush1.bf16.msra.mxu0 0
        %468 = vmatprep.subr.bf16.mxu0 0
        %469 = vmatpush1.bf16.msra.mxu0 0
        %470 = vmatprep.subr.bf16.mxu0 0
        %471 = vmatpush1.bf16.msra.mxu0 0
        %472 = vmatprep.subr.bf16.mxu0 0
        %473 = vmatpush1.bf16.msra.mxu0 0
        %474 = vmatprep.subr.bf16.mxu0 0
        %475 = vmatpush1.bf16.msra.mxu0 0
        %476 = vmatprep.subr.bf16.mxu0 0
        %477 = vmatpush1.bf16.msra.mxu0 0
        %478 = vmatprep.subr.bf16.mxu0 0
        %479 = vmatpush1.bf16.msra.mxu0 0
        %480 = vmatprep.subr.bf16.mxu0 0
        %481 = vmatpush1.bf16.msra.mxu0 0
        %482 = vmatprep.subr.bf16.mxu0 0
        %483 = vmatpush1.bf16.msra.mxu0 0
        %484 = vmatprep.subr.bf16.mxu0 0
        %485 = vmatpush1.bf16.msra.mxu0 0
        %486 = vmatprep.subr.bf16.mxu0 0
        %487 = vmatpush1.bf16.msra.mxu0 0
        %488 = vmatprep.mubr.bf16.mxu0 0
        %489 = vmatmul.mubr.bf16.gmra.mrb[0].mxu0 %v454
        %v490 = vpop.f32.mrb[0].mxu0
        %v491 = vadd.f32 %v438, %v490
        %v492 = vpop.f32.mrb[0].mxu0
        %v493 = vpop.f32.mrb[0].mxu0
        %v494 = vpop.f32.mrb[0].mxu0
        %495 = vdwg.mxu0
        %v496 = vld [vmem:[#allocation2] sm:$0xf]
        %v497 = vld [vmem:[%s317] sm:$0xf]
        %v498 = vld [vmem:[%s317 + $0x4] sm:$0xf]
        %v499 = vld [vmem:[%s317 + $0x8] sm:$0xf]
        %v500 = vld [vmem:[%s317 + $0xc] sm:$0xf]
        %v501 = vld [vmem:[%s317 + $0x10] sm:$0xf]
        %v502 = vld [vmem:[%s317 + $0x14] sm:$0xf]
        %v503 = vld [vmem:[%s317 + $0x18] sm:$0xf]
        %v504 = vld [vmem:[%s317 + $0x1c] sm:$0xf]
        %v505 = vld [vmem:[%s317 + $0x20] sm:$0xf]
        %v506 = vld [vmem:[%s317 + $0x24] sm:$0xf]
        %v507 = vld [vmem:[%s317 + $0x28] sm:$0xf]
        %v508 = vld [vmem:[%s317 + $0x2c] sm:$0xf]
        %v509 = vld [vmem:[%s317 + $0x30] sm:$0xf]
        %v510 = vld [vmem:[%s317 + $0x34] sm:$0xf]
        %v511 = vld [vmem:[%s317 + $0x38] sm:$0xf]
        %v512 = vld [vmem:[%s317 + $0x3c] sm:$0xf]
        %v529 = vunpack.c.l.b16 %v497
        %v530 = vunpack.c.l.b16 %v498
        %v531 = vunpack.c.l.b16 %v499
        %v532 = vunpack.c.l.b16 %v500
        %v533 = vunpack.c.l.b16 %v501
        %v534 = vunpack.c.l.b16 %v502
        %v535 = vunpack.c.l.b16 %v503
        %v536 = vunpack.c.l.b16 %v504
        %v537 = vunpack.c.l.b16 %v505
        %v538 = vunpack.c.l.b16 %v506
        %v539 = vunpack.c.l.b16 %v507
        %v540 = vunpack.c.l.b16 %v508
        %v541 = vunpack.c.l.b16 %v509
        %v542 = vunpack.c.l.b16 %v510
        %v543 = vunpack.c.l.b16 %v511
        %v544 = vunpack.c.l.b16 %v512
        %v545 = vpack.c.b16 %v530, %v529
        %v546 = vpack.c.b16 %v532, %v531
        %v547 = vpack.c.b16 %v534, %v533
        %v548 = vpack.c.b16 %v536, %v535
        %v549 = vpack.c.b16 %v538, %v537
        %v550 = vpack.c.b16 %v540, %v539
        %v551 = vpack.c.b16 %v542, %v541
        %v552 = vpack.c.b16 %v544, %v543
        %561 = vmatprep.subr.bf16.mxu0 0
        %562 = vmatpush1.bf16.msra.mxu0 %v545
        %563 = vmatprep.subr.bf16.mxu0 0
        %564 = vmatpush1.bf16.msra.mxu0 %v546
        %565 = vmatprep.subr.bf16.mxu0 0
        %566 = vmatpush1.bf16.msra.mxu0 %v547
        %567 = vmatprep.subr.bf16.mxu0 0
        %568 = vmatpush1.bf16.msra.mxu0 %v548
        %569 = vmatprep.subr.bf16.mxu0 0
        %570 = vmatpush1.bf16.msra.mxu0 %v549
        %571 = vmatprep.subr.bf16.mxu0 0
        %572 = vmatpush1.bf16.msra.mxu0 %v550
        %573 = vmatprep.subr.bf16.mxu0 0
        %574 = vmatpush1.bf16.msra.mxu0 %v551
        %575 = vmatprep.subr.bf16.mxu0 0
        %576 = vmatpush1.bf16.msra.mxu0 %v552
        %577 = vmatprep.subr.bf16.mxu0 0
        %578 = vmatpush1.bf16.msra.mxu0 0
        %579 = vmatprep.subr.bf16.mxu0 0
        %580 = vmatpush1.bf16.msra.mxu0 0
        %581 = vmatprep.subr.bf16.mxu0 0
        %582 = vmatpush1.bf16.msra.mxu0 0
        %583 = vmatprep.subr.bf16.mxu0 0
        %584 = vmatpush1.bf16.msra.mxu0 0
        %585 = vmatprep.subr.bf16.mxu0 0
        %586 = vmatpush1.bf16.msra.mxu0 0
        %587 = vmatprep.subr.bf16.mxu0 0
        %588 = vmatpush1.bf16.msra.mxu0 0
        %589 = vmatprep.subr.bf16.mxu0 0
        %590 = vmatpush1.bf16.msra.mxu0 0
        %591 = vmatprep.subr.bf16.mxu0 0
        %592 = vmatpush1.bf16.msra.mxu0 0
        %593 = vmatprep.mubr.bf16.mxu0 0
        %594 = vmatmul.mubr.bf16.gmra.mrb[0].mxu0 %v496
        %v595 = vpop.f32.mrb[0].mxu0
        %v596 = vadd.f32 0.0, %v595
        %v597 = vpop.f32.mrb[0].mxu0
        %v598 = vpop.f32.mrb[0].mxu0
        %v599 = vpop.f32.mrb[0].mxu0
        %600 = vdwg.mxu0
        %v601 = vadd.f32 %v491, %v596
        %602 = vst [vmem:[%s356] sm:$0xff] %v601
        %s603 = sand.u32 %s175, 1
        %s604 = scalar_lea.sflag [#allocation5], %s603
        %s605 = sand.u32 %s175, 1
        %s606 = smul.addr %s605, 8
        %s607 = scalar_lea.vmem [#allocation11], %s606
        // Predicated region
        $region61: #{tpu_custom_call.1} parent=39 // pred_check
          %p608 = pneg %p185
        $region62: #{tpu_custom_call.1} parent=39 // pred_check_branch
          %610 = sbr.rel (%p608) target = $region64
        $region63: #{tpu_custom_call.1} parent=39 // pred_region
          %s612 = ssub.s32 128, 128
          %613 = vsyncadd %s604, %s612
          %s614 = smul.addr %s32, 2
          %s615 = sadd.s32 %s33, %s614
          %s616 = smul.addr %s615, 128
          %s617 = scalar_lea.hbm %s5, %s616
          %s619 = sshll.u32 %s607, 4
          %s620 = int_to_ptr.vmem [resolvable:$true] %s619
          %622 = dma.vmem_to_hbm [thread:$0]  %s620, 128, %s617, %s604
        $region64: #{tpu_custom_call.1} parent=39 // pred_fallthru
          _
      $region40: #{tpu_custom_call.1} parent=5 // pred_fallthru
        _
      %p623 = scmp.le.s32.totalorder 2, %s23
      // Predicated region
      $region65: #{tpu_custom_call.1} parent=5 // pred_check
        %p624 = pneg %p623
      $region66: #{tpu_custom_call.1} parent=5 // pred_check_branch
        %626 = sbr.rel (%p624) target = $region68
      $region67: #{tpu_custom_call.1} parent=5 // pred_region
        %s627 = ssub.s32 %s23, 2
        // Predicated region
        $region69: #{tpu_custom_call.1} parent=67 // pred_check
          %p628 = pneg %p191
        $region70: #{tpu_custom_call.1} parent=67 // pred_check_branch
          %630 = sbr.rel (%p628) target = $region72
        $region71: #{tpu_custom_call.1} parent=67 // pred_region
          %s631 = sand.u32 %s176, 1
          %s632 = scalar_lea.sflag [#allocation5], %s631
          %s633 = sand.u32 %s176, 1
          %s634 = smul.addr %s633, 8
          %s635 = scalar_lea.vmem [#allocation11], %s634
          %636 = dma.done %s632, 128
        $region72: #{tpu_custom_call.1} parent=67 // pred_fallthru
          _
      $region68: #{tpu_custom_call.1} parent=5 // pred_fallthru
        _
    $region6: #{tpu_custom_call.1} parent=1 // loop_footer
      %s27 = sadd.s32 1, %s23
    $region7: #{tpu_custom_call.1} parent=1 // loop_footer_branch
      %22 = sbr.rel target = $region3
    $region8: #{tpu_custom_call.1} parent=1 // loop_exit
      _
    %637 = vsyncpa [#allocation4], 1
    %s638 = scalar_lea.sflag [#allocation4], 1
    %639 = vsyncpa %s638, 1
    %640 = vsyncpa [#allocation7], 1
    %s641 = scalar_lea.sflag [#allocation7], 1
    %642 = vsyncpa %s641, 1
    %643 = vsyncpa [#allocation10], 1
    %s644 = scalar_lea.sflag [#allocation10], 1
    %645 = vsyncpa %s644, 1
    %646 = vsyncpa [#allocation5], 1
    %s647 = scalar_lea.sflag [#allocation5], 1
    %648 = vsyncpa %s647, 1

</llo_original>
